<compile_context>
chip_gen: v6e
topology: v6e:2x2x1
jax: 0.10.0
libtpu: 0.0.40
codegen_flags: <defaults>
</compile_context>

<pallas_src>
import math

import jax
import jax.numpy as jnp
from jax import lax
from jax.experimental import pallas as pl
from jax.experimental.pallas import tpu as pltpu


def _round_up(x, m):
    return ((x + m - 1) // m) * m


def _largest_divisor_tile(total, unit, target):
    """Largest multiple of `unit` dividing `total` that is <= target (total % unit == 0)."""
    t = min(target, total)
    t = (t // unit) * unit
    while t > unit and total % t:
        t -= unit
    return max(t, unit)


def _vmem_footprint(tile_b, tile_k, k_pad, rank, out_f, itemsize):
    """Conservative VMEM bytes for the chosen tiling (double buffers included)."""
    lane_rank = _round_up(rank, 128)                      # accumulator is lane-padded
    return (2 * tile_b * tile_k * itemsize                # x tile, double-buffered
            + 2 * rank * k_pad * itemsize                 # resident lora_A
            + 2 * rank * out_f * itemsize                 # resident lora_B^T
            + 2 * tile_b * out_f * itemsize               # output tile, double-buffered
            + tile_b * lane_rank * 4                      # f32 accumulator scratch
            + 2 * tile_b * min(out_f, 1024) * 4)          # finalize chunk temporaries


def _lora_kernel(x_ref, a_ref, bt_ref, o_ref, acc_ref):
    # x_ref : (tile_b, tile_k)        native dtype
    # a_ref : (rank,   k_pad)         native dtype, fully VMEM-resident
    # bt_ref: (rank,   out_features)  native dtype, pre-scaled lora_B^T, resident
    # o_ref : (tile_b, out_features)
    # acc   : (tile_b, rank) f32 scratch, persists across the K axis
    k = pl.program_id(1)
    tile_k = x_ref.shape[1]

    @pl.when(k == 0)
    def _init():
        acc_ref[...] = jnp.zeros_like(acc_ref)

    # Slice the resident A in VMEM (fetched from HBM once for the whole kernel)
    # instead of re-DMAing a (rank, tile_k) slice per (batch tile, K step).
    k0 = pl.multiple_of(k * tile_k, 128)
    a_blk = a_ref[:, pl.ds(k0, tile_k)]                   # (rank, tile_k)

    # (tile_b, tile_k) . (rank, tile_k) contracting last dims -> (tile_b, rank).
    # Only the small (rank, tile_k) operand needs an MXU-side relayout.
    acc_ref[...] += lax.dot_general(
        x_ref[...], a_blk,
        dimension_numbers=(((1,), (1,)), ((), ())),
        preferred_element_type=jnp.float32,
    )

    @pl.when(k == pl.num_programs(1) - 1)
    def _finalize():
        out_f = o_ref.shape[1]
        chunk = min(1024, out_f)
        # Tiny (tile_b, rank) intermediate; alpha/rank is already folded into bt_ref.
        tmp = acc_ref[...].astype(bt_ref.dtype)
        # Chunk over out_features (lane-dense stores) so the f32 temporary is
        # capped at tile_b x chunk instead of tile_b x out_features.
        for c0 in range(0, out_f, chunk):
            c1 = min(c0 + chunk, out_f)
            o_ref[:, c0:c1] = jnp.dot(
                tmp, bt_ref[:, c0:c1], preferred_element_type=jnp.float32
            ).astype(o_ref.dtype)


def lora_forward(x, lora_A, lora_B, *, alpha=1.0, tile_b=None, tile_k=None):
    """Pallas LoRA forward: (batch, out) = (x @ A^T) @ (alpha/rank * B)^T."""
    batch, in_features = x.shape
    rank, in_features_a = lora_A.shape
    out_features, rank_b = lora_B.shape
    assert in_features_a == in_features and rank_b == rank
    scaling = alpha / rank

    itemsize = jnp.dtype(x.dtype).itemsize
    sub = max(8, 32 // itemsize)                 # sublane multiple: 8 f32, 16 bf16, 32 int8

    # --- K tiling: pad in_features to a lane multiple; prefer 256-deep K steps
    #     (v6e/v7x MXU contraction depth), fall back to 128. ---
    k_pad = _round_up(in_features, 128)
    auto_k = tile_k is None
    if auto_k:
        unit = 256 if k_pad % 256 == 0 else 128
        tile_k = _largest_divisor_tile(k_pad, unit, 2048)
    assert k_pad % tile_k == 0 and tile_k % 128 == 0

    # --- Batch tiling: multiple of the sublane count; aim for >= 2 batch tiles so
    #     the "parallel" axis can shard across v7x's two TensorCores. ---
    if tile_b is None:
        half = _round_up(max(1, (batch + 1) // 2), sub)
        tile_b = max(sub, min(256, half))
        # Shrink tiles until the footprint fits a conservative cross-generation
        # VMEM budget.  (Output could also be single-buffered to halve its cost;
        # shrinking tile_b keeps the call portable across Pallas versions.)
        budget = 28 << 20
        while (_vmem_footprint(tile_b, tile_k, k_pad, rank, out_features, itemsize)
               > budget and tile_b > sub):
            tile_b = max(sub, ((tile_b // 2) // sub) * sub)
        while (_vmem_footprint(tile_b, tile_k, k_pad, rank, out_features, itemsize)
               > budget and auto_k and tile_k % 256 == 0):
            tile_k //= 2
    assert tile_b % sub == 0 or tile_b == batch

    b_pad = _round_up(batch, tile_b)
    grid = (b_pad // tile_b, k_pad // tile_k)

    # --- Layout plumbing outside the kernel (tiny / one-off ops): zero-pad x and
    #     A so every block obeys the (8, 128) rule; zeros do not change results
    #     and padded output rows are sliced off below. ---
    x_in = x
    if b_pad != batch or k_pad != in_features:
        x_in = jnp.pad(x, ((0, b_pad - batch), (0, k_pad - in_features)))
    a_in = lora_A
    if k_pad != in_features:
        a_in = jnp.pad(lora_A, ((0, 0), (0, k_pad - in_features)))
    # Pre-transpose B to lane-dense (rank, out_features) and fold the alpha/rank
    # scaling into it (f32 math), removing the per-batch-tile scaling pass.
    lora_B_t = (lora_B.astype(jnp.float32).T * scaling).astype(lora_B.dtype)

    footprint = _vmem_footprint(tile_b, tile_k, k_pad, rank, out_features, itemsize)
    vmem_limit = int(min(48 << 20, max(32 << 20, footprint + (8 << 20))))

    flops = 2 * batch * in_features * rank + 2 * batch * rank * out_features
    bytes_accessed = (
        batch * in_features * itemsize
        + rank * in_features * jnp.dtype(lora_A.dtype).itemsize
        + out_features * rank * jnp.dtype(lora_B.dtype).itemsize
        + batch * out_features * itemsize
    )
    cost = pl.CostEstimate(flops=flops, transcendentals=0,
                           bytes_accessed=bytes_accessed)

    out = pl.pallas_call(
        _lora_kernel,
        out_shape=jax.ShapeDtypeStruct((b_pad, out_features), x.dtype),
        grid_spec=pltpu.PrefetchScalarGridSpec(
            num_scalar_prefetch=0,
            grid=grid,
            in_specs=[
                pl.BlockSpec((tile_b, tile_k), lambda i, k: (i, k)),       # x tile
                pl.BlockSpec((rank, k_pad), lambda i, k: (0, 0)),          # lora_A, resident
                pl.BlockSpec((rank, out_features), lambda i, k: (0, 0)),   # B^T (scaled), resident
            ],
            out_specs=pl.BlockSpec((tile_b, out_features), lambda i, k: (i, 0)),
            scratch_shapes=[pltpu.VMEM((tile_b, rank), jnp.float32)],
        ),
        compiler_params=pltpu.CompilerParams(
            dimension_semantics=("parallel", "arbitrary"),
            vmem_limit_bytes=vmem_limit,
        ),
        cost_estimate=cost,
    )(x_in, a_in, lora_B_t)

    if b_pad != batch:
        out = out[:batch]
    return out


def lora_reference(x, lora_A, lora_B, *, alpha=1.0):
    rank = lora_A.shape[0]
    scaling = alpha / rank
    tmp = lora_A @ x.T            # (rank, batch)
    out = lora_B @ tmp            # (out_features, batch)
    return out.T * scaling        # (batch, out_features)


def kaiming_uniform(key, shape, a=math.sqrt(5)):
    """Matches nn.init.kaiming_uniform_ for a 2D weight (fan_in = shape[1])."""
    fan_in = shape[1]
    gain = math.sqrt(2.0 / (1.0 + a * a))
    bound = gain * math.sqrt(3.0 / fan_in)
    return jax.random.uniform(key, shape, jnp.float32, -bound, bound)


if __name__ == "__main__":
    # Small, deterministic example shapes (consistent with the module).
    batch, in_features, out_features, rank, alpha = 8, 32, 32, 4, 1.0

    key = jax.random.PRNGKey(0)
    kx, ka, kb = jax.random.split(key, 3)

    x = jax.random.normal(kx, (batch, in_features), jnp.float32)
    # Faithful to the module: lora_A kaiming-uniform, lora_B zeros (output is zero then).
    lora_A = kaiming_uniform(ka, (rank, in_features))
    lora_B_zero = jnp.zeros((out_features, rank), jnp.float32)
    # Also a deterministic nonzero B so the numerical check is meaningful.
    lora_B_rand = 0.01 * jax.random.normal(kb, (out_features, rank), jnp.float32)

    for lora_B in (lora_B_zero, lora_B_rand):
        out = jax.block_until_ready(lora_forward(x, lora_A, lora_B, alpha=alpha))
        ref = lora_reference(x, lora_A, lora_B, alpha=alpha)
        assert out.shape == (batch, out_features)
        assert jnp.allclose(out, ref, atol=1e-5, rtol=1e-5)

    # bf16 path (the kernel is HBM-bound, so halving x bytes ~halves wall clock);
    # compare against an f32 reference on the bf16-rounded inputs, looser tolerance.
    xb = x.astype(jnp.bfloat16)
    Ab = lora_A.astype(jnp.bfloat16)
    Bb = lora_B_rand.astype(jnp.bfloat16)
    outb = jax.block_until_ready(lora_forward(xb, Ab, Bb, alpha=alpha)).astype(jnp.float32)
    refb = lora_reference(xb.astype(jnp.float32), Ab.astype(jnp.float32),
                          Bb.astype(jnp.float32), alpha=alpha)
    assert outb.shape == (batch, out_features)
    assert jnp.allclose(outb, refb, atol=2e-2, rtol=2e-2)

    print("KERNEL_OK")
</pallas_src>

<mosaic_0001>
module attributes {stable_mosaic.version = 11 : i64} {
  func.func @_lora_kernel(%arg0: i32, %arg1: i32, %arg2: memref<8x128xf32, #tpu.memory_space<vmem>>, %arg3: memref<4x128xf32, #tpu.memory_space<vmem>>, %arg4: memref<4x32xf32, #tpu.memory_space<vmem>>, %arg5: memref<8x32xf32, #tpu.memory_space<vmem>>, %arg6: memref<8x4xf32, #tpu.memory_space<vmem>>) attributes {dimension_semantics = [#tpu.dimension_semantics<parallel>, #tpu.dimension_semantics<arbitrary>], iteration_bounds = array<i64: 1, 1>, scalar_prefetch = 0 : i64, scratch_operands = 1 : i64, tpu.core_type = #tpu.core_type<tc>, window_params = [{transform_indices = @transform_0, window_bounds = array<i64: 8, 128>}, {pipeline_mode = #tpu.pipeline_mode<synchronous>, transform_indices = @transform_1, window_bounds = array<i64: 4, 128>}, {pipeline_mode = #tpu.pipeline_mode<synchronous>, transform_indices = @transform_2, window_bounds = array<i64: 4, 32>}, {transform_indices = @transform_3, window_bounds = array<i64: 8, 32>}]} {
    %c0_i32 = arith.constant 0 : i32
    %0 = arith.cmpi eq, %arg1, %c0_i32 : i32
    %1 = arith.extui %0 : i1 to i32
    %c0_i32_0 = arith.constant 0 : i32
    %2 = arith.cmpi ne, %1, %c0_i32_0 : i32
    scf.if %2 {
      %cst_9 = arith.constant 0.000000e+00 : f32
      %15 = vector.broadcast %cst_9 : f32 to vector<8x4xf32>
      %c0_10 = arith.constant 0 : index
      %c0_11 = arith.constant 0 : index
      %16 = vector.load %arg6[%c0_10, %c0_11] : memref<8x4xf32, #tpu.memory_space<vmem>>, vector<8x4xf32>
      tpu.vector_store %arg6[%c0_10, %c0_11], %15 {strides = array<i32>} : memref<8x4xf32, #tpu.memory_space<vmem>>, vector<8x4xf32>,
    } else {
    }
    %c128_i32 = arith.constant 128 : i32
    %3 = arith.muli %arg1, %c128_i32 : i32
    %4 = tpu.assume_multiple %3, 128 : i32
    %c0 = arith.constant 0 : index
    %5 = arith.index_cast %4 : i32 to index
    %6 = vector.load %arg3[%c0, %5] : memref<4x128xf32, #tpu.memory_space<vmem>>, vector<4x128xf32>
    %c0_1 = arith.constant 0 : index
    %c0_2 = arith.constant 0 : index
    %7 = vector.load %arg6[%c0_1, %c0_2] : memref<8x4xf32, #tpu.memory_space<vmem>>, vector<8x4xf32>
    %c0_3 = arith.constant 0 : index
    %c0_4 = arith.constant 0 : index
    %8 = vector.load %arg2[%c0_3, %c0_4] : memref<8x128xf32, #tpu.memory_space<vmem>>, vector<8x128xf32>
    %cst = arith.constant dense<0.000000e+00> : vector<8x4xf32>
    %9 = tpu.matmul %8, %6, %cst {dimension_numbers = #tpu.dot_dimension_numbers<[1], [1], [0], [0], [0, 0, 1, 0], [], []>} : vector<8x128xf32>, vector<4x128xf32>, vector<8x4xf32> -> vector<8x4xf32>
    %10 = arith.addf %7, %9 : vector<8x4xf32>
    %c0_5 = arith.constant 0 : index
    %c0_6 = arith.constant 0 : index
    %11 = vector.load %arg6[%c0_5, %c0_6] : memref<8x4xf32, #tpu.memory_space<vmem>>, vector<8x4xf32>
    tpu.vector_store %arg6[%c0_5, %c0_6], %10 {strides = array<i32>} : memref<8x4xf32, #tpu.memory_space<vmem>>, vector<8x4xf32>,
    %c0_i32_7 = arith.constant 0 : i32
    %12 = arith.cmpi eq, %arg1, %c0_i32_7 : i32
    %13 = arith.extui %12 : i1 to i32
    %c0_i32_8 = arith.constant 0 : i32
    %14 = arith.cmpi ne, %13, %c0_i32_8 : i32
    scf.if %14 {
      %c0_9 = arith.constant 0 : index
      %c0_10 = arith.constant 0 : index
      %15 = vector.load %arg6[%c0_9, %c0_10] : memref<8x4xf32, #tpu.memory_space<vmem>>, vector<8x4xf32>
      %c0_11 = arith.constant 0 : index
      %c0_12 = arith.constant 0 : index
      %16 = vector.load %arg4[%c0_11, %c0_12] : memref<4x32xf32, #tpu.memory_space<vmem>>, vector<4x32xf32>
      %cst_13 = arith.constant dense<0.000000e+00> : vector<8x32xf32>
      %17 = tpu.matmul %15, %16, %cst_13 {dimension_numbers = #tpu.dot_dimension_numbers<[1], [0], [0], [1], [0, 0, 1, 1], [], []>} : vector<8x4xf32>, vector<4x32xf32>, vector<8x32xf32> -> vector<8x32xf32>
      %c0_14 = arith.constant 0 : index
      %c0_15 = arith.constant 0 : index
      %18 = vector.load %arg5[%c0_14, %c0_15] : memref<8x32xf32, #tpu.memory_space<vmem>>, vector<8x32xf32>
      tpu.vector_store %arg5[%c0_14, %c0_15], %17 {strides = array<i32>} : memref<8x32xf32, #tpu.memory_space<vmem>>, vector<8x32xf32>,
    } else {
    }
    return
  }
  func.func @transform_0(%arg0: i32, %arg1: i32) -> (i32, i32) {
    %c0_i32 = arith.constant 0 : i32
    return %arg0, %arg1 : i32, i32
  }
  func.func @transform_1(%arg0: i32, %arg1: i32) -> (i32, i32) {
    %c0_i32 = arith.constant 0 : i32
    %c0_i32_0 = arith.constant 0 : i32
    %c0_i32_1 = arith.constant 0 : i32
    return %c0_i32, %c0_i32_0 : i32, i32
  }
  func.func @transform_2(%arg0: i32, %arg1: i32) -> (i32, i32) {
    %c0_i32 = arith.constant 0 : i32
    %c0_i32_0 = arith.constant 0 : i32
    %c0_i32_1 = arith.constant 0 : i32
    return %c0_i32, %c0_i32_0 : i32, i32
  }
  func.func @transform_3(%arg0: i32, %arg1: i32) -> (i32, i32) {
    %c0_i32 = arith.constant 0 : i32
    %c0_i32_0 = arith.constant 0 : i32
    return %arg0, %c0_i32 : i32, i32
  }
}

</mosaic_0001>

<llo_original>
// kernel: tpu_custom_call.1
$region0: #{tpu_custom_call.1}
  #allocation0 [shape = 'u32[]', space=smem, size = 0x4, offset = 0x4, fixed_abs, tag = 'smem constant byte address 0x4 - core index']
  #allocation1 [shape = 'u32[144,128]{1,0:T(1,128)}', space=vmem, size = 0x12000, scoped, tag = 'internal scratch']
  #allocation2 [shape = 'f32[8,4]{1,0:T(8,128)}', space=vmem, size = 0x1000, scoped, tag = 'scratch operand']
  %s0 = inlined_call_operand.hbm [shape: f32[8,128], index: 0, kind: input, shape index: {}]
  %s1 = inlined_call_operand.hbm [shape: f32[4,128], index: 1, kind: input, shape index: {}]
  %s2 = inlined_call_operand.hbm [shape: f32[4,32], index: 2, kind: input, shape index: {}]
  %s3 = inlined_call_operand.hbm [shape: f32[8,32], index: 3, kind: output, shape index: {}]
  %s4 = sld [smem:[#allocation0]]
  $region42: #{tpu_custom_call.1} parent=0
    _
  %s6 = ssub.s32 1, %s4
  %s7 = scalar_select 0, %s6, %s4
  $region1: #{tpu_custom_call.1} parent=0
    #allocation3 [shape = 'u8[4096]{0}', space=vmem, size = 0x1000, scoped, tag = 'input window, operand 0, single buffered']
    #allocation4 [shape = 's32[1]{0}', space=sflag, size = 0x4, scoped, tag = 'scoped memory for tpu_custom_call.1']
    #allocation5 [shape = 's32[1]{0}', space=sflag, size = 0x4, scoped, tag = 'scoped memory for tpu_custom_call.1']
    #allocation6 [shape = 'u8[2048]{0}', space=vmem, size = 0x800, scoped, tag = 'input window, operand 1, single buffered']
    #allocation7 [shape = 's32[1]{0}', space=sflag, size = 0x4, scoped, tag = 'scoped memory for tpu_custom_call.1']
    #allocation8 [shape = 'u8[2048]{0}', space=vmem, size = 0x800, scoped, tag = 'input window, operand 2, single buffered']
    #allocation9 [shape = 'u8[4096]{0}', space=vmem, size = 0x1000, scoped, tag = 'output window, operand 0, single buffered']
    %8 = vsyncpa [#allocation4], 0
    %9 = vsyncpa [#allocation7], 0
    %10 = vsyncpa [#allocation5], 0
    // Predicated region
    $region2: #{tpu_custom_call.1} parent=1 // pred_check
      _
    $region3: #{tpu_custom_call.1} parent=1 // pred_check_branch
      %12 = sbr.rel (0) target = $region5
    $region4: #{tpu_custom_call.1} parent=1 // pred_region
      %s14 = ssub.s32 128, 128
      %15 = vsyncadd [#allocation4], %s14
      %s17 = sshll.u32 [#allocation3], 4
      %s18 = int_to_ptr.vmem [resolvable:$true] %s17
      %20 = dma.hbm_to_vmem [thread:$0]  %s0, 128, %s18, [#allocation4]
    $region5: #{tpu_custom_call.1} parent=1 // pred_fallthru
      _
    // Predicated region
    $region6: #{tpu_custom_call.1} parent=1 // pred_check
      _
    $region7: #{tpu_custom_call.1} parent=1 // pred_check_branch
      %22 = sbr.rel (0) target = $region9
    $region8: #{tpu_custom_call.1} parent=1 // pred_region
      %s24 = ssub.s32 64, 64
      %25 = vsyncadd [#allocation7], %s24
      %s27 = sshll.u32 [#allocation6], 4
      %s28 = int_to_ptr.vmem [resolvable:$true] %s27
      %30 = dma.hbm_to_vmem [thread:$0]  %s1, 64, %s28, [#allocation7]
    $region9: #{tpu_custom_call.1} parent=1 // pred_fallthru
      _
    // Predicated region
    $region10: #{tpu_custom_call.1} parent=1 // pred_check
      _
    $region11: #{tpu_custom_call.1} parent=1 // pred_check_branch
      %32 = sbr.rel (0) target = $region13
    $region12: #{tpu_custom_call.1} parent=1 // pred_region
      %s34 = ssub.s32 64, 64
      %35 = vsyncadd [#allocation7], %s34
      %s37 = sshll.u32 [#allocation8], 4
      %s38 = int_to_ptr.vmem [resolvable:$true] %s37
      %40 = dma.hbm_to_vmem [thread:$0]  %s2, 64, %s38, [#allocation7]
    $region13: #{tpu_custom_call.1} parent=1 // pred_fallthru
      _
    // Predicated region
    $region14: #{tpu_custom_call.1} parent=1 // pred_check
      _
    $region15: #{tpu_custom_call.1} parent=1 // pred_check_branch
      %42 = sbr.rel (0) target = $region17
    $region16: #{tpu_custom_call.1} parent=1 // pred_region
      %43 = dma.done [#allocation4], 128
    $region17: #{tpu_custom_call.1} parent=1 // pred_fallthru
      _
    // Predicated region
    $region18: #{tpu_custom_call.1} parent=1 // pred_check
      _
    $region19: #{tpu_custom_call.1} parent=1 // pred_check_branch
      %45 = sbr.rel (0) target = $region21
    $region20: #{tpu_custom_call.1} parent=1 // pred_region
      %46 = dma.done [#allocation7], 64
    $region21: #{tpu_custom_call.1} parent=1 // pred_fallthru
      _
    // Predicated region
    $region22: #{tpu_custom_call.1} parent=1 // pred_check
      _
    $region23: #{tpu_custom_call.1} parent=1 // pred_check_branch
      %48 = sbr.rel (0) target = $region25
    $region24: #{tpu_custom_call.1} parent=1 // pred_region
      %49 = dma.done [#allocation7], 64
    $region25: #{tpu_custom_call.1} parent=1 // pred_fallthru
      _
    %p50 = scmp.eq.s32.totalorder 0, 0
    // Predicated region
    $region26: #{tpu_custom_call.1} parent=1 // pred_check
      %p51 = pneg %p50
    $region27: #{tpu_custom_call.1} parent=1 // pred_check_branch
      %53 = sbr.rel (%p51) target = $region29
    $region28: #{tpu_custom_call.1} parent=1 // pred_region
      %vm54 = vcmask 31744
      %55 = vst.msk [vmem:[#allocation2] sm:$0xff] %vm54, 0.0
    $region29: #{tpu_custom_call.1} parent=1 // pred_fallthru
      _
    %s56 = smul.u32 0, 128
    %s57 = sshra.s32 %s56, 7
    %s58 = sand.u32 %s56, 127
    %s59 = scalar_lea.vmem [#allocation6], %s57
    %v60 = vld [vmem:[%s59] sm:$0xf]
    %v61 = vld [vmem:[#allocation2] sm:$0xff]
    %v62 = vld [vmem:[#allocation3] sm:$0xff]
    %63 = vmatprep.subr.mxu0 0.0
    %64 = vmatpush1.xpose.msra.mxu0 0.0
    %65 = vmatprep.subr.mxu0 0.0
    %66 = vmatpush1.xpose.msra.mxu0 0.0
    %67 = vmatprep.subr.mxu0 0.0
    %68 = vmatpush1.xpose.msra.mxu0 0.0
    %69 = vmatprep.subr.mxu0 0.0
    %70 = vmatpush1.xpose.msra.mxu0 0.0
    %71 = vmatprep.subr.mxu0 0.0
    %72 = vmatpush1.xpose.msra.mxu0 0.0
    %73 = vmatprep.subr.mxu0 0.0
    %74 = vmatpush1.xpose.msra.mxu0 0.0
    %75 = vmatprep.subr.mxu0 0.0
    %76 = vmatpush1.xpose.msra.mxu0 0.0
    %77 = vmatprep.subr.mxu0 0.0
    %78 = vmatpush1.xpose.msra.mxu0 0.0
    %79 = vmatprep.subr.mxu0 0.0
    %80 = vmatpush1.xpose.msra.mxu0 0.0
    %81 = vmatprep.subr.mxu0 0.0
    %82 = vmatpush1.xpose.msra.mxu0 0.0
    %83 = vmatprep.subr.mxu0 0.0
    %84 = vmatpush1.xpose.msra.mxu0 0.0
    %85 = vmatprep.subr.mxu0 0.0
    %86 = vmatpush1.xpose.msra.mxu0 0.0
    %87 = vmatprep.subr.mxu0 0.0
    %88 = vmatpush1.xpose.msra.mxu0 0.0
    %89 = vmatprep.subr.mxu0 0.0
    %90 = vmatpush1.xpose.msra.mxu0 0.0
    %91 = vmatprep.subr.mxu0 0.0
    %92 = vmatpush1.xpose.msra.mxu0 0.0
    %93 = vmatprep.subr.mxu0 0.0
    %94 = vmatpush1.xpose.msra.mxu0 %v60
    %95 = vmatprep.subr.mxu0 0.0
    %96 = vmatpush2.xpose.msra.mxu0 0.0
    %97 = vmatprep.subr.mxu0 0.0
    %98 = vmatpush2.xpose.msra.mxu0 0.0
    %99 = vmatprep.subr.mxu0 0.0
    %100 = vmatpush2.xpose.msra.mxu0 0.0
    %101 = vmatprep.subr.mxu0 0.0
    %102 = vmatpush2.xpose.msra.mxu0 0.0
    %103 = vmatprep.subr.mxu0 0.0
    %104 = vmatpush2.xpose.msra.mxu0 0.0
    %105 = vmatprep.subr.mxu0 0.0
    %106 = vmatpush2.xpose.msra.mxu0 0.0
    %107 = vmatprep.subr.mxu0 0.0
    %108 = vmatpush2.xpose.msra.mxu0 0.0
    %109 = vmatprep.subr.mxu0 0.0
    %110 = vmatpush2.xpose.msra.mxu0 0.0
    %111 = vmatprep.subr.mxu0 0.0
    %112 = vmatpush2.xpose.msra.mxu0 0.0
    %113 = vmatprep.subr.mxu0 0.0
    %114 = vmatpush2.xpose.msra.mxu0 0.0
    %115 = vmatprep.subr.mxu0 0.0
    %116 = vmatpush2.xpose.msra.mxu0 0.0
    %117 = vmatprep.subr.mxu0 0.0
    %118 = vmatpush2.xpose.msra.mxu0 0.0
    %119 = vmatprep.subr.mxu0 0.0
    %120 = vmatpush2.xpose.msra.mxu0 0.0
    %121 = vmatprep.subr.mxu0 0.0
    %122 = vmatpush2.xpose.msra.mxu0 0.0
    %123 = vmatprep.subr.mxu0 0.0
    %124 = vmatpush2.xpose.msra.mxu0 0.0
    %125 = vmatprep.subr.mxu0 0.0
    %126 = vmatpush2.xpose.msra.mxu0 0.0
    %127 = vmatprep.mubr.f32.mxu0 0.0
    %128 = vmatmul.mubr.f32.gmra.mxu0 %v62
    %v129 = vpop.f32.mrf.mxu0
    %v130 = vadd.f32 0.0, %v129
    %v131 = vpop.f32.mrf.mxu0
    %132 = vdwg.mxu0
    %v133 = vadd.f32 %v61, %v130
    %vm134 = vcmask 31744
    %135 = vst.msk [vmem:[#allocation2] sm:$0xff] %vm134, %v133
    // Predicated region
    $region30: #{tpu_custom_call.1} parent=1 // pred_check
      %p136 = pneg %p50
    $region31: #{tpu_custom_call.1} parent=1 // pred_check_branch
      %138 = sbr.rel (%p136) target = $region33
    $region32: #{tpu_custom_call.1} parent=1 // pred_region
      %v139 = vld [vmem:[#allocation2] sm:$0xff]
      %v140 = vld [vmem:[#allocation8] sm:$0xf]
      %v142 = vsel %vm134, %v139, 0
      %vm144 = vcmask 1043456
      %v146 = vsel %vm144, %v140, 0
      %148 = vmatprep.subr.mxu0 0.0
      %149 = vmatpush1.msra.mxu0 0.0
      %150 = vmatprep.subr.mxu0 0.0
      %151 = vmatpush1.msra.mxu0 0.0
      %152 = vmatprep.subr.mxu0 0.0
      %153 = vmatpush1.msra.mxu0 0.0
      %154 = vmatprep.subr.mxu0 0.0
      %155 = vmatpush1.msra.mxu0 0.0
      %156 = vmatprep.subr.mxu0 0.0
      %157 = vmatpush1.msra.mxu0 0.0
      %158 = vmatprep.subr.mxu0 0.0
      %159 = vmatpush1.msra.mxu0 0.0
      %160 = vmatprep.subr.mxu0 0.0
      %161 = vmatpush1.msra.mxu0 0.0
      %162 = vmatprep.subr.mxu0 0.0
      %163 = vmatpush1.msra.mxu0 0.0
      %164 = vmatprep.subr.mxu0 0.0
      %165 = vmatpush1.msra.mxu0 0.0
      %166 = vmatprep.subr.mxu0 0.0
      %167 = vmatpush1.msra.mxu0 0.0
      %168 = vmatprep.subr.mxu0 0.0
      %169 = vmatpush1.msra.mxu0 0.0
      %170 = vmatprep.subr.mxu0 0.0
      %171 = vmatpush1.msra.mxu0 0.0
      %172 = vmatprep.subr.mxu0 0.0
      %173 = vmatpush1.msra.mxu0 0.0
      %174 = vmatprep.subr.mxu0 0.0
      %175 = vmatpush1.msra.mxu0 0.0
      %176 = vmatprep.subr.mxu0 0.0
      %177 = vmatpush1.msra.mxu0 0.0
      %178 = vmatprep.subr.mxu0 0.0
      %179 = vmatpush1.msra.mxu0 %v146
      %180 = vmatprep.subr.mxu0 0.0
      %181 = vmatpush2.msra.mxu0 0.0
      %182 = vmatprep.subr.mxu0 0.0
      %183 = vmatpush2.msra.mxu0 0.0
      %184 = vmatprep.subr.mxu0 0.0
      %185 = vmatpush2.msra.mxu0 0.0
      %186 = vmatprep.subr.mxu0 0.0
      %187 = vmatpush2.msra.mxu0 0.0
      %188 = vmatprep.subr.mxu0 0.0
      %189 = vmatpush2.msra.mxu0 0.0
      %190 = vmatprep.subr.mxu0 0.0
      %191 = vmatpush2.msra.mxu0 0.0
      %192 = vmatprep.subr.mxu0 0.0
      %193 = vmatpush2.msra.mxu0 0.0
      %194 = vmatprep.subr.mxu0 0.0
      %195 = vmatpush2.msra.mxu0 0.0
      %196 = vmatprep.subr.mxu0 0.0
      %197 = vmatpush2.msra.mxu0 0.0
      %198 = vmatprep.subr.mxu0 0.0
      %199 = vmatpush2.msra.mxu0 0.0
      %200 = vmatprep.subr.mxu0 0.0
      %201 = vmatpush2.msra.mxu0 0.0
      %202 = vmatprep.subr.mxu0 0.0
      %203 = vmatpush2.msra.mxu0 0.0
      %204 = vmatprep.subr.mxu0 0.0
      %205 = vmatpush2.msra.mxu0 0.0
      %206 = vmatprep.subr.mxu0 0.0
      %207 = vmatpush2.msra.mxu0 0.0
      %208 = vmatprep.subr.mxu0 0.0
      %209 = vmatpush2.msra.mxu0 0.0
      %210 = vmatprep.subr.mxu0 0.0
      %211 = vmatpush2.msra.mxu0 0.0
      %212 = vmatprep.mubr.f32.mxu0 0.0
      %213 = vmatmul.mubr.f32.gmra.mxu0 %v142
      %v214 = vpop.f32.mrf.mxu0
      %v215 = vadd.f32 0.0, %v214
      %v216 = vpop.f32.mrf.mxu0
      %217 = vdwg.mxu0
      %vm218 = vcmask 261120
      %219 = vst.msk [vmem:[#allocation9] sm:$0xff] %vm218, %v215
    $region33: #{tpu_custom_call.1} parent=1 // pred_fallthru
      _
    // Predicated region
    $region34: #{tpu_custom_call.1} parent=1 // pred_check
      _
    $region35: #{tpu_custom_call.1} parent=1 // pred_check_branch
      %221 = sbr.rel (0) target = $region37
    $region36: #{tpu_custom_call.1} parent=1 // pred_region
      %s223 = ssub.s32 128, 128
      %224 = vsyncadd [#allocation5], %s223
      %s226 = sshll.u32 [#allocation9], 4
      %s227 = int_to_ptr.vmem [resolvable:$true] %s226
      %229 = dma.vmem_to_hbm [thread:$0]  %s227, 128, %s3, [#allocation5]
    $region37: #{tpu_custom_call.1} parent=1 // pred_fallthru
      _
    // Predicated region
    $region38: #{tpu_custom_call.1} parent=1 // pred_check
      _
    $region39: #{tpu_custom_call.1} parent=1 // pred_check_branch
      %231 = sbr.rel (0) target = $region41
    $region40: #{tpu_custom_call.1} parent=1 // pred_region
      %232 = dma.done [#allocation5], 128
    $region41: #{tpu_custom_call.1} parent=1 // pred_fallthru
      _
    %233 = vsyncpa [#allocation4], 1
    %234 = vsyncpa [#allocation7], 1
    %235 = vsyncpa [#allocation5], 1

</llo_original>
